<compile_context>
chip_gen: v7x
topology: tpu7x:2x2x1
jax: 0.10.0
libtpu: 0.0.40
codegen_flags: <defaults>
</compile_context>

<pallas_src>
import functools

import jax
import jax.numpy as jnp
from jax.experimental import pallas as pl
from jax.experimental.pallas import tpu as pltpu


def _round_up(n: int, m: int) -> int:
    return ((n + m - 1) // m) * m


def mlp_kernel(x_ref, w1_ref, b1_ref, w2_ref, b2_ref, o_ref):
    # Hidden layer: h = x @ W1 + b1 ; LeakyReLU (PyTorch default slope = 0.01).
    x = x_ref[...].astype(w1_ref.dtype)            # in-VMEM cast if compute dtype is bf16
    h = jnp.dot(x, w1_ref[...], preferred_element_type=jnp.float32)
    h = h + b1_ref[...]                            # (tb, hid) + (1, hid), f32
    h = jnp.where(h > 0, h, 0.01 * h)              # LeakyReLU in f32
    # Output layer: out = h @ W2 + b2.
    out = jnp.dot(h.astype(w2_ref.dtype), w2_ref[...],
                  preferred_element_type=jnp.float32)
    out = out + b2_ref[...]                        # (tb, out_p) + (1, out_p), f32
    o_ref[...] = out.astype(o_ref.dtype)           # lane-dense store (out_p % 128 == 0)


def prepare_params(w1, b1, w2, b2, compute_dtype=None):
    """One-time parameter prep (hoisted out of the per-call path).

    w1: (in, hid), b1: (hid,) or (1, hid), w2: (hid, out), b2: (out,) or (1, out).
    Returns (w1_p, b1_p, w2_p, b2_p, out_size) where only w2/b2's output lane dim is
    zero-padded to a multiple of 128 and weights are optionally cast to bf16.
    """
    in_size, hid_size = w1.shape
    out_size = int(w2.shape[1])
    out_p = _round_up(out_size, 128)
    wd = jnp.dtype(compute_dtype) if compute_dtype is not None else w1.dtype

    w1_p = jnp.asarray(w1, wd)
    b1_p = jnp.asarray(b1, jnp.float32).reshape(1, hid_size)
    w2_p = jnp.zeros((hid_size, out_p), wd).at[:, :out_size].set(jnp.asarray(w2, wd))
    b2_p = (jnp.zeros((1, out_p), jnp.float32)
            .at[:, :out_size].set(jnp.asarray(b2, jnp.float32).reshape(1, out_size)))
    return w1_p, b1_p, w2_p, b2_p, out_size


@functools.partial(jax.jit, static_argnames=("out_size", "tile_b"))
def network_forward(x, w1, b1, w2, b2, *, out_size, tile_b: int = 512):
    """x: (B, in_size); params from prepare_params (w2/b2 pre-padded to out_p)."""
    B, in_size = x.shape
    hid_size = w1.shape[1]
    out_p = w2.shape[1]
    out_dtype = x.dtype

    itemsize = jnp.dtype(out_dtype).itemsize
    w_itemsize = jnp.dtype(w1.dtype).itemsize
    sub = max(8, 32 // itemsize)                   # sublane multiple: 8 f32 / 16 bf16 / 32 i8

    # --- batch tile: as large as VMEM allows; >=2 grid steps when batch permits
    #     so "parallel" can shard across v7x's two TensorCores. ---
    tb = _round_up(min(tile_b, _round_up(B, sub)), sub)
    if B > 2 * sub:
        tb = min(tb, _round_up(-(-B // 2), sub))

    def vmem_bytes(tb_):
        return (2 * tb_ * in_size * itemsize                                  # x (double-buffered)
                + 2 * tb_ * out_p * itemsize                                  # out (double-buffered)
                + 2 * (in_size * hid_size + hid_size * out_p) * w_itemsize    # weights (pipeliner allocs 2 bufs)
                + 2 * (hid_size + out_p) * 4                                  # biases (f32)
                + tb_ * (hid_size + out_p) * 4)                               # f32 intermediates

    try:
        vmem_cap = int(0.7 * pltpu.get_tpu_info().vmem_capacity_bytes)        # 44 MiB on v7x, ~89 MiB on v5e/v6e
    except Exception:
        vmem_cap = 44 << 20                                                   # v7x-safe fallback
    while tb > sub and vmem_bytes(tb) > vmem_cap:
        tb = _round_up(tb // 2, sub)

    Bp = _round_up(B, tb)
    grid = (Bp // tb,)
    vmem_limit = int(min(max(vmem_bytes(tb) * 1.25, 32 << 20), vmem_cap))

    # Only the batch dim is (cheaply) zero-padded per call; padded rows are sliced off.
    x_p = x if Bp == B else jnp.pad(x, ((0, Bp - B), (0, 0)))

    out_padded = pl.pallas_call(
        mlp_kernel,
        out_shape=jax.ShapeDtypeStruct((Bp, out_p), out_dtype),
        grid=grid,
        in_specs=[
            # Activations stream over the batch grid axis; K dim is full-extent
            # (no 128-padding -> no inflated HBM reads, no per-call x re-pad).
            pl.BlockSpec((tb, in_size), lambda i: (i, 0)),
            # Weights / biases: constant index_map -> VMEM-resident, no per-step DMA.
            pl.BlockSpec((in_size, hid_size), lambda i: (0, 0)),
            pl.BlockSpec((1, hid_size), lambda i: (0, 0)),
            pl.BlockSpec((hid_size, out_p), lambda i: (0, 0)),
            pl.BlockSpec((1, out_p), lambda i: (0, 0)),
        ],
        out_specs=pl.BlockSpec((tb, out_p), lambda i: (i, 0)),
        compiler_params=pltpu.CompilerParams(
            dimension_semantics=("parallel",),     # megacore sharding on v7x
            vmem_limit_bytes=vmem_limit,
        ),
    )(x_p, w1, b1, w2, b2)

    return out_padded[:B, :out_size]


def init_params(key, in_size, hid_size, out_size, dtype=jnp.float32):
    """Deterministic init mimicking nn.Linear's uniform(-1/sqrt(fan_in), 1/sqrt(fan_in))."""
    k1, k2, k3, k4 = jax.random.split(key, 4)
    bound1 = 1.0 / (in_size ** 0.5)
    bound2 = 1.0 / (hid_size ** 0.5)
    w1 = jax.random.uniform(k1, (in_size, hid_size), dtype, -bound1, bound1)
    b1 = jax.random.uniform(k2, (hid_size,), dtype, -bound1, bound1)
    w2 = jax.random.uniform(k3, (hid_size, out_size), dtype, -bound2, bound2)
    b2 = jax.random.uniform(k4, (out_size,), dtype, -bound2, bound2)
    return w1, b1, w2, b2


if __name__ == "__main__":
    key = jax.random.PRNGKey(0)
    k_in, k_params = jax.random.split(key)

    B, IN_SIZE, HID_SIZE, OUT_SIZE = 8, 32, 64, 16
    x = jax.random.normal(k_in, (B, IN_SIZE), jnp.float32)
    w1, b1, w2, b2 = init_params(k_params, IN_SIZE, HID_SIZE, OUT_SIZE)

    # Reference in plain JAX (same math as the PyTorch module, full f32).
    h_ref = x @ w1 + b1[None, :]
    h_ref = jnp.where(h_ref > 0, h_ref, 0.01 * h_ref)
    ref = h_ref @ w2 + b2[None, :]

    # --- f32 compute path (bit-close to the PyTorch reference) ---
    w1p, b1p, w2p, b2p, out_size = prepare_params(w1, b1, w2, b2)
    out = network_forward(x, w1p, b1p, w2p, b2p, out_size=out_size)
    jax.block_until_ready(out)
    assert out.shape == ref.shape
    assert jnp.allclose(out, ref, atol=1e-4, rtol=1e-4), (
        float(jnp.max(jnp.abs(out - ref))))

    # --- bf16 MXU path (f32 accumulation); looser tolerance for bf16 rounding ---
    w1b, b1b, w2b, b2b, out_size_b = prepare_params(
        w1, b1, w2, b2, compute_dtype=jnp.bfloat16)
    out_bf = network_forward(x, w1b, b1b, w2b, b2b, out_size=out_size_b)
    jax.block_until_ready(out_bf)
    assert jnp.allclose(out_bf, ref, atol=5e-2, rtol=5e-2), (
        float(jnp.max(jnp.abs(out_bf - ref))))

    print("KERNEL_OK")
</pallas_src>

<mosaic_0001>
module attributes {stable_mosaic.version = 11 : i64} {
  func.func @mlp_kernel(%arg0: i32, %arg1: memref<8x32xf32, #tpu.memory_space<vmem>>, %arg2: memref<32x64xf32, #tpu.memory_space<vmem>>, %arg3: memref<1x64xf32, #tpu.memory_space<vmem>>, %arg4: memref<64x128xf32, #tpu.memory_space<vmem>>, %arg5: memref<1x128xf32, #tpu.memory_space<vmem>>, %arg6: memref<8x128xf32, #tpu.memory_space<vmem>>) attributes {dimension_semantics = [#tpu.dimension_semantics<parallel>], iteration_bounds = array<i64: 1>, scalar_prefetch = 0 : i64, scratch_operands = 0 : i64, tpu.core_type = #tpu.core_type<tc>, window_params = [{transform_indices = @transform_0, window_bounds = array<i64: 8, 32>}, {pipeline_mode = #tpu.pipeline_mode<synchronous>, transform_indices = @transform_1, window_bounds = array<i64: 32, 64>}, {pipeline_mode = #tpu.pipeline_mode<synchronous>, transform_indices = @transform_2, window_bounds = array<i64: 1, 64>}, {pipeline_mode = #tpu.pipeline_mode<synchronous>, transform_indices = @transform_3, window_bounds = array<i64: 64, 128>}, {pipeline_mode = #tpu.pipeline_mode<synchronous>, transform_indices = @transform_4, window_bounds = array<i64: 1, 128>}, {transform_indices = @transform_5, window_bounds = array<i64: 8, 128>}]} {
    %c0 = arith.constant 0 : index
    %c0_0 = arith.constant 0 : index
    %0 = vector.load %arg1[%c0, %c0_0] : memref<8x32xf32, #tpu.memory_space<vmem>>, vector<8x32xf32>
    %c0_1 = arith.constant 0 : index
    %c0_2 = arith.constant 0 : index
    %1 = vector.load %arg2[%c0_1, %c0_2] : memref<32x64xf32, #tpu.memory_space<vmem>>, vector<32x64xf32>
    %cst = arith.constant dense<0.000000e+00> : vector<8x64xf32>
    %2 = tpu.matmul %0, %1, %cst {dimension_numbers = #tpu.dot_dimension_numbers<[1], [0], [0], [1], [0, 0, 1, 1], [], []>} : vector<8x32xf32>, vector<32x64xf32>, vector<8x64xf32> -> vector<8x64xf32>
    %c0_3 = arith.constant 0 : index
    %c0_4 = arith.constant 0 : index
    %3 = vector.load %arg3[%c0_3, %c0_4] : memref<1x64xf32, #tpu.memory_space<vmem>>, vector<1x64xf32>
    %4 = vector.broadcast %3 : vector<1x64xf32> to vector<8x64xf32>
    %5 = arith.addf %2, %4 : vector<8x64xf32>
    %cst_5 = arith.constant 0.000000e+00 : f32
    %6 = vector.broadcast %cst_5 : f32 to vector<8x64xf32>
    %7 = arith.cmpf ogt, %5, %6 : vector<8x64xf32>
    %cst_6 = arith.constant 0.00999999977 : f32
    %8 = vector.broadcast %cst_6 : f32 to vector<8x64xf32>
    %9 = arith.mulf %8, %5 : vector<8x64xf32>
    %10 = arith.select %7, %5, %9 : vector<8x64xi1>, vector<8x64xf32>
    %c0_7 = arith.constant 0 : index
    %c0_8 = arith.constant 0 : index
    %11 = vector.load %arg4[%c0_7, %c0_8] : memref<64x128xf32, #tpu.memory_space<vmem>>, vector<64x128xf32>
    %cst_9 = arith.constant dense<0.000000e+00> : vector<8x128xf32>
    %12 = tpu.matmul %10, %11, %cst_9 {dimension_numbers = #tpu.dot_dimension_numbers<[1], [0], [0], [1], [0, 0, 1, 1], [], []>} : vector<8x64xf32>, vector<64x128xf32>, vector<8x128xf32> -> vector<8x128xf32>
    %c0_10 = arith.constant 0 : index
    %c0_11 = arith.constant 0 : index
    %13 = vector.load %arg5[%c0_10, %c0_11] : memref<1x128xf32, #tpu.memory_space<vmem>>, vector<1x128xf32>
    %14 = vector.broadcast %13 : vector<1x128xf32> to vector<8x128xf32>
    %15 = arith.addf %12, %14 : vector<8x128xf32>
    %c0_12 = arith.constant 0 : index
    %c0_13 = arith.constant 0 : index
    %16 = vector.load %arg6[%c0_12, %c0_13] : memref<8x128xf32, #tpu.memory_space<vmem>>, vector<8x128xf32>
    tpu.vector_store %arg6[%c0_12, %c0_13], %15 {strides = array<i32>} : memref<8x128xf32, #tpu.memory_space<vmem>>, vector<8x128xf32>,
    return
  }
  func.func @transform_0(%arg0: i32) -> (i32, i32) {
    %c0_i32 = arith.constant 0 : i32
    %c0_i32_0 = arith.constant 0 : i32
    return %arg0, %c0_i32 : i32, i32
  }
  func.func @transform_1(%arg0: i32) -> (i32, i32) {
    %c0_i32 = arith.constant 0 : i32
    %c0_i32_0 = arith.constant 0 : i32
    %c0_i32_1 = arith.constant 0 : i32
    return %c0_i32, %c0_i32_0 : i32, i32
  }
  func.func @transform_2(%arg0: i32) -> (i32, i32) {
    %c0_i32 = arith.constant 0 : i32
    %c0_i32_0 = arith.constant 0 : i32
    %c0_i32_1 = arith.constant 0 : i32
    return %c0_i32, %c0_i32_0 : i32, i32
  }
  func.func @transform_3(%arg0: i32) -> (i32, i32) {
    %c0_i32 = arith.constant 0 : i32
    %c0_i32_0 = arith.constant 0 : i32
    %c0_i32_1 = arith.constant 0 : i32
    return %c0_i32, %c0_i32_0 : i32, i32
  }
  func.func @transform_4(%arg0: i32) -> (i32, i32) {
    %c0_i32 = arith.constant 0 : i32
    %c0_i32_0 = arith.constant 0 : i32
    %c0_i32_1 = arith.constant 0 : i32
    return %c0_i32, %c0_i32_0 : i32, i32
  }
  func.func @transform_5(%arg0: i32) -> (i32, i32) {
    %c0_i32 = arith.constant 0 : i32
    %c0_i32_0 = arith.constant 0 : i32
    return %arg0, %c0_i32 : i32, i32
  }
}

</mosaic_0001>

<llo_original>
// kernel: network_forward.1
$region0: #{network_forward.1}
  #allocation0 [shape = 'u32[]', space=smem, size = 0x4, offset = 0x4, fixed_abs, tag = 'smem constant byte address 0x4 - core index']
  #allocation1 [shape = 'u32[144,128]{1,0:T(1,128)}', space=vmem, size = 0x12000, scoped, tag = 'internal scratch']
  %s0 = inlined_call_operand.hbm [shape: f32[8,32], index: 0, kind: input, shape index: {}]
  %s1 = inlined_call_operand.hbm [shape: f32[32,64], index: 1, kind: input, shape index: {}]
  %s2 = inlined_call_operand.vmem [shape: f32[1,64], index: 2, kind: input, shape index: {}]
  %s3 = inlined_call_operand.hbm [shape: f32[64,128], index: 3, kind: input, shape index: {}]
  %s4 = inlined_call_operand.vmem [shape: f32[1,128], index: 4, kind: input, shape index: {}]
  %s5 = inlined_call_operand.hbm [shape: f32[8,128], index: 5, kind: output, shape index: {}]
  %s6 = sld [smem:[#allocation0]]
  $region42: #{network_forward.1} parent=0
    _
  %s8 = ssub.s32 1, %s6
  %s9 = scalar_select 0, %s8, %s6
  $region1: #{network_forward.1} parent=0
    #allocation2 [shape = 'u8[4096]{0}', space=vmem, size = 0x1000, scoped, tag = 'input window, operand 0, single buffered']
    #allocation3 [shape = 's32[1]{0}', space=sflag, size = 0x4, scoped, tag = 'scoped memory for network_forward.1']
    #allocation4 [shape = 's32[1]{0}', space=sflag, size = 0x4, scoped, tag = 'scoped memory for network_forward.1']
    #allocation5 [shape = 'u8[16384]{0}', space=vmem, size = 0x4000, scoped, tag = 'input window, operand 1, single buffered']
    #allocation6 [shape = 's32[1]{0}', space=sflag, size = 0x4, scoped, tag = 'scoped memory for network_forward.1']
    #allocation7 [shape = 'u8[32768]{0}', space=vmem, size = 0x8000, scoped, tag = 'input window, operand 3, single buffered']
    #allocation8 [shape = 'u8[4096]{0}', space=vmem, size = 0x1000, scoped, tag = 'output window, operand 0, single buffered']
    %10 = vsyncpa [#allocation3], 0
    %11 = vsyncpa [#allocation6], 0
    %12 = vsyncpa [#allocation4], 0
    // Predicated region
    $region2: #{network_forward.1} parent=1 // pred_check
      _
    $region3: #{network_forward.1} parent=1 // pred_check_branch
      %14 = sbr.rel (0) target = $region5
    $region4: #{network_forward.1} parent=1 // pred_region
      %s16 = ssub.s32 128, 128
      %17 = vsyncadd [#allocation3], %s16
      %s19 = sshll.u32 [#allocation2], 4
      %s20 = int_to_ptr.vmem [resolvable:$true] %s19
      %22 = dma.hbm_to_vmem [thread:$0]  %s0, 128, %s20, [#allocation3]
    $region5: #{network_forward.1} parent=1 // pred_fallthru
      _
    // Predicated region
    $region6: #{network_forward.1} parent=1 // pred_check
      _
    $region7: #{network_forward.1} parent=1 // pred_check_branch
      %24 = sbr.rel (0) target = $region9
    $region8: #{network_forward.1} parent=1 // pred_region
      %s26 = ssub.s32 512, 512
      %27 = vsyncadd [#allocation6], %s26
      %s28 = sshll.u32 [#allocation5], 4
      %s29 = int_to_ptr.vmem [resolvable:$true] %s28
      %34 = dma.hbm_to_vmem [thread:$0]  %s1, 512, %s29, [#allocation6], 128, 128, 8
    $region9: #{network_forward.1} parent=1 // pred_fallthru
      _
    // Predicated region
    $region10: #{network_forward.1} parent=1 // pred_check
      _
    $region11: #{network_forward.1} parent=1 // pred_check_branch
      %36 = sbr.rel (0) target = $region13
    $region12: #{network_forward.1} parent=1 // pred_region
      _
    $region13: #{network_forward.1} parent=1 // pred_fallthru
      _
    // Predicated region
    $region14: #{network_forward.1} parent=1 // pred_check
      _
    $region15: #{network_forward.1} parent=1 // pred_check_branch
      %38 = sbr.rel (0) target = $region17
    $region16: #{network_forward.1} parent=1 // pred_region
      %s40 = ssub.s32 1024, 1024
      %41 = vsyncadd [#allocation6], %s40
      %s42 = sshll.u32 [#allocation7], 4
      %s43 = int_to_ptr.vmem [resolvable:$true] %s42
      %48 = dma.hbm_to_vmem [thread:$0]  %s3, 1024, %s43, [#allocation6], 128, 128, 8
    $region17: #{network_forward.1} parent=1 // pred_fallthru
      _
    // Predicated region
    $region18: #{network_forward.1} parent=1 // pred_check
      _
    $region19: #{network_forward.1} parent=1 // pred_check_branch
      %50 = sbr.rel (0) target = $region21
    $region20: #{network_forward.1} parent=1 // pred_region
      _
    $region21: #{network_forward.1} parent=1 // pred_fallthru
      _
    // Predicated region
    $region22: #{network_forward.1} parent=1 // pred_check
      _
    $region23: #{network_forward.1} parent=1 // pred_check_branch
      %52 = sbr.rel (0) target = $region25
    $region24: #{network_forward.1} parent=1 // pred_region
      %53 = dma.done [#allocation3], 128
    $region25: #{network_forward.1} parent=1 // pred_fallthru
      _
    // Predicated region
    $region26: #{network_forward.1} parent=1 // pred_check
      _
    $region27: #{network_forward.1} parent=1 // pred_check_branch
      %55 = sbr.rel (0) target = $region29
    $region28: #{network_forward.1} parent=1 // pred_region
      %56 = dma.done [#allocation6], 512
    $region29: #{network_forward.1} parent=1 // pred_fallthru
      _
    // Predicated region
    $region30: #{network_forward.1} parent=1 // pred_check
      _
    $region31: #{network_forward.1} parent=1 // pred_check_branch
      %58 = sbr.rel (0) target = $region33
    $region32: #{network_forward.1} parent=1 // pred_region
      %59 = dma.done [#allocation6], 1024
    $region33: #{network_forward.1} parent=1 // pred_fallthru
      _
    %v60 = vld [vmem:[#allocation2] sm:$0xff]
    %v61 = vld [vmem:[#allocation5] sm:$0xff]
    %v62 = vld [vmem:[#allocation5 + $0x8] sm:$0xff]
    %v63 = vld [vmem:[#allocation5 + $0x10] sm:$0xff]
    %v64 = vld [vmem:[#allocation5 + $0x18] sm:$0xff]
    %v65 = vld [vmem:[%s2] sm:$0x1]
    %v67 = vlaneseq
    %v68 = vshrl.u32 %v67, 7
    %v69 = vsub.s32 0, %v68
    %v70 = vrot.slane %v65, %v69
    %vm72 = vcmask 261120
    %v74 = vsel %vm72, %v60, 0
    %76 = vmatprep.subr.mxu0 0.0
    %77 = vmatpush1.msra.mxu0 %v61
    %78 = vmatprep.subr.mxu0 0.0
    %79 = vmatpush1.msra.mxu0 %v62
    %80 = vmatprep.subr.mxu0 0.0
    %81 = vmatpush1.msra.mxu0 %v63
    %82 = vmatprep.subr.mxu0 0.0
    %83 = vmatpush1.msra.mxu0 %v64
    %84 = vmatprep.subr.mxu0 0.0
    %85 = vmatpush1.msra.mxu0 0.0
    %86 = vmatprep.subr.mxu0 0.0
    %87 = vmatpush1.msra.mxu0 0.0
    %88 = vmatprep.subr.mxu0 0.0
    %89 = vmatpush1.msra.mxu0 0.0
    %90 = vmatprep.subr.mxu0 0.0
    %91 = vmatpush1.msra.mxu0 0.0
    %92 = vmatprep.subr.mxu0 0.0
    %93 = vmatpush1.msra.mxu0 0.0
    %94 = vmatprep.subr.mxu0 0.0
    %95 = vmatpush1.msra.mxu0 0.0
    %96 = vmatprep.subr.mxu0 0.0
    %97 = vmatpush1.msra.mxu0 0.0
    %98 = vmatprep.subr.mxu0 0.0
    %99 = vmatpush1.msra.mxu0 0.0
    %100 = vmatprep.subr.mxu0 0.0
    %101 = vmatpush1.msra.mxu0 0.0
    %102 = vmatprep.subr.mxu0 0.0
    %103 = vmatpush1.msra.mxu0 0.0
    %104 = vmatprep.subr.mxu0 0.0
    %105 = vmatpush1.msra.mxu0 0.0
    %106 = vmatprep.subr.mxu0 0.0
    %107 = vmatpush1.msra.mxu0 0.0
    %108 = vmatprep.subr.mxu0 0.0
    %109 = vmatpush1.msra.mxu0 0.0
    %110 = vmatprep.subr.mxu0 0.0
    %111 = vmatpush1.msra.mxu0 0.0
    %112 = vmatprep.subr.mxu0 0.0
    %113 = vmatpush1.msra.mxu0 0.0
    %114 = vmatprep.subr.mxu0 0.0
    %115 = vmatpush1.msra.mxu0 0.0
    %116 = vmatprep.subr.mxu0 0.0
    %117 = vmatpush1.msra.mxu0 0.0
    %118 = vmatprep.subr.mxu0 0.0
    %119 = vmatpush1.msra.mxu0 0.0
    %120 = vmatprep.subr.mxu0 0.0
    %121 = vmatpush1.msra.mxu0 0.0
    %122 = vmatprep.subr.mxu0 0.0
    %123 = vmatpush1.msra.mxu0 0.0
    %124 = vmatprep.subr.mxu0 0.0
    %125 = vmatpush1.msra.mxu0 0.0
    %126 = vmatprep.subr.mxu0 0.0
    %127 = vmatpush1.msra.mxu0 0.0
    %128 = vmatprep.subr.mxu0 0.0
    %129 = vmatpush1.msra.mxu0 0.0
    %130 = vmatprep.subr.mxu0 0.0
    %131 = vmatpush1.msra.mxu0 0.0
    %132 = vmatprep.subr.mxu0 0.0
    %133 = vmatpush1.msra.mxu0 0.0
    %134 = vmatprep.subr.mxu0 0.0
    %135 = vmatpush1.msra.mxu0 0.0
    %136 = vmatprep.subr.mxu0 0.0
    %137 = vmatpush1.msra.mxu0 0.0
    %138 = vmatprep.subr.mxu0 0.0
    %139 = vmatpush1.msra.mxu0 0.0
    %140 = vmatprep.mubr.f32.mxu0 0.0
    %141 = vmatmul.mubr.f32.gmra.mrb[0].mxu0 %v74
    %v142 = vpop.f32.mrb[0].mxu0
    %v143 = vadd.f32 %v70, %v142
    %v144 = vpop.f32.mrb[0].mxu0
    %145 = vdwg.mxu0
    %vm146 = vcmp.gt.f32.partialorder %v143, 0.0
    %v147 = vmul.f32 %v143, 0.01
    %v148 = vsel %vm146, %v143, %v147
    %v149 = vld [vmem:[#allocation7] sm:$0xff]
    %v150 = vld [vmem:[#allocation7 + $0x8] sm:$0xff]
    %v151 = vld [vmem:[#allocation7 + $0x10] sm:$0xff]
    %v152 = vld [vmem:[#allocation7 + $0x18] sm:$0xff]
    %v153 = vld [vmem:[#allocation7 + $0x20] sm:$0xff]
    %v154 = vld [vmem:[#allocation7 + $0x28] sm:$0xff]
    %v155 = vld [vmem:[#allocation7 + $0x30] sm:$0xff]
    %v156 = vld [vmem:[#allocation7 + $0x38] sm:$0xff]
    %v157 = vld [vmem:[%s4] sm:$0x1]
    %v159 = vlaneseq
    %v160 = vshrl.u32 %v159, 7
    %v161 = vsub.s32 0, %v160
    %v162 = vrot.slane %v157, %v161
    %vm164 = vcmask 523264
    %v166 = vsel %vm164, %v148, 0
    %168 = vmatprep.subr.mxu0 0.0
    %169 = vmatpush1.msra.mxu0 %v149
    %170 = vmatprep.subr.mxu0 0.0
    %171 = vmatpush1.msra.mxu0 %v150
    %172 = vmatprep.subr.mxu0 0.0
    %173 = vmatpush1.msra.mxu0 %v151
    %174 = vmatprep.subr.mxu0 0.0
    %175 = vmatpush1.msra.mxu0 %v152
    %176 = vmatprep.subr.mxu0 0.0
    %177 = vmatpush1.msra.mxu0 %v153
    %178 = vmatprep.subr.mxu0 0.0
    %179 = vmatpush1.msra.mxu0 %v154
    %180 = vmatprep.subr.mxu0 0.0
    %181 = vmatpush1.msra.mxu0 %v155
    %182 = vmatprep.subr.mxu0 0.0
    %183 = vmatpush1.msra.mxu0 %v156
    %184 = vmatprep.subr.mxu0 0.0
    %185 = vmatpush1.msra.mxu0 0.0
    %186 = vmatprep.subr.mxu0 0.0
    %187 = vmatpush1.msra.mxu0 0.0
    %188 = vmatprep.subr.mxu0 0.0
    %189 = vmatpush1.msra.mxu0 0.0
    %190 = vmatprep.subr.mxu0 0.0
    %191 = vmatpush1.msra.mxu0 0.0
    %192 = vmatprep.subr.mxu0 0.0
    %193 = vmatpush1.msra.mxu0 0.0
    %194 = vmatprep.subr.mxu0 0.0
    %195 = vmatpush1.msra.mxu0 0.0
    %196 = vmatprep.subr.mxu0 0.0
    %197 = vmatpush1.msra.mxu0 0.0
    %198 = vmatprep.subr.mxu0 0.0
    %199 = vmatpush1.msra.mxu0 0.0
    %200 = vmatprep.subr.mxu0 0.0
    %201 = vmatpush1.msra.mxu0 0.0
    %202 = vmatprep.subr.mxu0 0.0
    %203 = vmatpush1.msra.mxu0 0.0
    %204 = vmatprep.subr.mxu0 0.0
    %205 = vmatpush1.msra.mxu0 0.0
    %206 = vmatprep.subr.mxu0 0.0
    %207 = vmatpush1.msra.mxu0 0.0
    %208 = vmatprep.subr.mxu0 0.0
    %209 = vmatpush1.msra.mxu0 0.0
    %210 = vmatprep.subr.mxu0 0.0
    %211 = vmatpush1.msra.mxu0 0.0
    %212 = vmatprep.subr.mxu0 0.0
    %213 = vmatpush1.msra.mxu0 0.0
    %214 = vmatprep.subr.mxu0 0.0
    %215 = vmatpush1.msra.mxu0 0.0
    %216 = vmatprep.subr.mxu0 0.0
    %217 = vmatpush1.msra.mxu0 0.0
    %218 = vmatprep.subr.mxu0 0.0
    %219 = vmatpush1.msra.mxu0 0.0
    %220 = vmatprep.subr.mxu0 0.0
    %221 = vmatpush1.msra.mxu0 0.0
    %222 = vmatprep.subr.mxu0 0.0
    %223 = vmatpush1.msra.mxu0 0.0
    %224 = vmatprep.subr.mxu0 0.0
    %225 = vmatpush1.msra.mxu0 0.0
    %226 = vmatprep.subr.mxu0 0.0
    %227 = vmatpush1.msra.mxu0 0.0
    %228 = vmatprep.subr.mxu0 0.0
    %229 = vmatpush1.msra.mxu0 0.0
    %230 = vmatprep.subr.mxu0 0.0
    %231 = vmatpush1.msra.mxu0 0.0
    %232 = vmatprep.mubr.f32.mxu0 0.0
    %233 = vmatmul.mubr.f32.gmra.mrb[0].mxu0 %v166
    %v234 = vpop.f32.mrb[0].mxu0
    %v235 = vadd.f32 %v162, %v234
    %v236 = vpop.f32.mrb[0].mxu0
    %237 = vdwg.mxu0
    %238 = vst [vmem:[#allocation8] sm:$0xff] %v235
    // Predicated region
    $region34: #{network_forward.1} parent=1 // pred_check
      _
    $region35: #{network_forward.1} parent=1 // pred_check_branch
      %240 = sbr.rel (0) target = $region37
    $region36: #{network_forward.1} parent=1 // pred_region
      %s242 = ssub.s32 128, 128
      %243 = vsyncadd [#allocation4], %s242
      %s245 = sshll.u32 [#allocation8], 4
      %s246 = int_to_ptr.vmem [resolvable:$true] %s245
      %248 = dma.vmem_to_hbm [thread:$0]  %s246, 128, %s5, [#allocation4]
    $region37: #{network_forward.1} parent=1 // pred_fallthru
      _
    // Predicated region
    $region38: #{network_forward.1} parent=1 // pred_check
      _
    $region39: #{network_forward.1} parent=1 // pred_check_branch
      %250 = sbr.rel (0) target = $region41
    $region40: #{network_forward.1} parent=1 // pred_region
      %251 = dma.done [#allocation4], 128
    $region41: #{network_forward.1} parent=1 // pred_fallthru
      _
    %252 = vsyncpa [#allocation3], 1
    %253 = vsyncpa [#allocation6], 1
    %254 = vsyncpa [#allocation4], 1

</llo_original>
